<compile_context>
chip_gen: v7x
topology: tpu7x:2x2x1
jax: 0.10.0
libtpu: 0.0.40
codegen_flags: <defaults>
</compile_context>

<pallas_src>
import math

import jax
import jax.numpy as jnp
from jax.experimental import pallas as pl
from jax.experimental.pallas import tpu as pltpu


def _round_up(x, m):
    return ((x + m - 1) // m) * m


def _gcn_kernel(adj_ref, feats_k_ref, feats_i_ref, w_top_ref, w_bot_ref, b_ref,
                out_ref, ax_acc):
    """Grid = (row blocks i [parallel], contraction blocks k [arbitrary])."""
    k = pl.program_id(1)

    @pl.when(k == 0)
    def _init():
        ax_acc[...] = jnp.zeros_like(ax_acc)

    # Stream the adjacency row-block along k; accumulate Ax = adj @ feats.
    ax_acc[...] += jnp.dot(adj_ref[...], feats_k_ref[...],
                           preferred_element_type=jnp.float32)

    @pl.when(k == pl.num_programs(1) - 1)
    def _finalize():
        # Z = [feats, Ax] @ W + b  ==  feats @ W[:F] + Ax @ W[F:] + b
        z = jnp.dot(feats_i_ref[...], w_top_ref[...],
                    preferred_element_type=jnp.float32)
        z = z + jnp.dot(ax_acc[...], w_bot_ref[...],
                        preferred_element_type=jnp.float32)
        z = z + b_ref[...]
        out_ref[...] = z.astype(out_ref.dtype)


def graph_convolution(adj_mx, feats, weight, bias, *, tm=256, tk=512):
    """Pallas wrapper. Shapes: adj (N,N), feats (N,F), weight (2F,E), bias (1,E)."""
    n, f = feats.shape
    e = weight.shape[1]
    assert adj_mx.shape == (n, n)
    assert weight.shape == (2 * f, e)
    assert bias.shape == (1, e)

    out_dtype = feats.dtype

    # Lane-dense padding: F, E to multiples of 128; N so both tiles divide it.
    f_pad = _round_up(f, 128)
    e_pad = _round_up(e, 128)
    n_pad = _round_up(n, 128)
    tm = min(tm, n_pad)
    tk = min(tk, n_pad)
    n_pad = _round_up(n_pad, math.lcm(tm, tk))

    adj_p = jnp.zeros((n_pad, n_pad), adj_mx.dtype).at[:n, :n].set(adj_mx)
    feats_p = jnp.zeros((n_pad, f_pad), feats.dtype).at[:n, :f].set(feats)
    # Split the weight so the concat never has to exist on-chip.
    w_top = jnp.zeros((f_pad, e_pad), weight.dtype).at[:f, :e].set(weight[:f])
    w_bot = jnp.zeros((f_pad, e_pad), weight.dtype).at[:f, :e].set(weight[f:])
    bias_p = jnp.zeros((1, e_pad), bias.dtype).at[:, :e].set(bias)

    grid = (n_pad // tm, n_pad // tk)

    # Advisory cost estimate so XLA can overlap this call with neighbors.
    flops = 2 * n_pad * n_pad * f_pad + 2 * n_pad * (2 * f_pad) * e_pad
    bytes_accessed = 4 * (n_pad * n_pad + 2 * n_pad * f_pad
                          + 2 * f_pad * e_pad + e_pad + n_pad * e_pad)

    # Per-step VMEM footprint: double-buffered streamed blocks + resident
    # weights/bias/accumulator/output.  Capped at 48 MiB (safe on v7x's 64 MiB).
    vmem_bytes = 4 * (2 * (tm * tk + tk * f_pad)       # adj / feats_k, 2-deep
                      + tm * f_pad                     # feats_i (resident)
                      + 2 * f_pad * e_pad + e_pad      # W_top, W_bot, bias
                      + 2 * tm * e_pad                 # out (double-buffered)
                      + tm * f_pad)                    # Ax accumulator
    vmem_limit = int(min(48 * 1024 * 1024,
                         max(2 * vmem_bytes, 16 * 1024 * 1024)))

    out_p = pl.pallas_call(
        _gcn_kernel,
        out_shape=jax.ShapeDtypeStruct((n_pad, e_pad), out_dtype),
        grid_spec=pltpu.PrefetchScalarGridSpec(
            num_scalar_prefetch=0,
            grid=grid,
            in_specs=[
                pl.BlockSpec((tm, tk), lambda i, k: (i, k)),        # adj tile
                pl.BlockSpec((tk, f_pad), lambda i, k: (k, 0)),     # feats (contraction)
                pl.BlockSpec((tm, f_pad), lambda i, k: (i, 0)),     # feats (self term)
                pl.BlockSpec((f_pad, e_pad), lambda i, k: (0, 0)),  # W_top (resident)
                pl.BlockSpec((f_pad, e_pad), lambda i, k: (0, 0)),  # W_bot (resident)
                pl.BlockSpec((1, e_pad), lambda i, k: (0, 0)),      # bias (resident)
            ],
            out_specs=pl.BlockSpec((tm, e_pad), lambda i, k: (i, 0)),
            scratch_shapes=[pltpu.VMEM((tm, f_pad), jnp.float32)],
        ),
        compiler_params=pltpu.CompilerParams(
            dimension_semantics=("parallel", "arbitrary"),
            vmem_limit_bytes=vmem_limit,
        ),
        cost_estimate=pl.CostEstimate(
            flops=flops, transcendentals=0, bytes_accessed=bytes_accessed),
    )(adj_p, feats_p, feats_p, w_top, w_bot, bias_p)

    return out_p[:n, :e]


def init_graph_conv_params(key, num_feats, num_embeds, dtype=jnp.float32):
    """Deterministic re-implementation of GraphConvolution.init_weights()."""
    stdv = 1.0 / math.sqrt(num_embeds)
    k_w, k_b = jax.random.split(key)
    weight = jax.random.uniform(
        k_w, (num_feats * 2, num_embeds), dtype=dtype, minval=-stdv, maxval=stdv
    )
    bias = jax.random.uniform(
        k_b, (1, num_embeds), dtype=dtype, minval=-stdv, maxval=stdv
    )
    return weight, bias


if __name__ == "__main__":
    key = jax.random.PRNGKey(0)
    k_adj, k_feats, k_params = jax.random.split(key, 3)

    # Small synthetic graph: 8 nodes, 16 input features, 32 output embeddings.
    num_nodes, num_feats, num_embeds = 8, 16, 32

    # Row-normalized (mean-aggregation) adjacency with self-free neighbors.
    raw_adj = (jax.random.uniform(k_adj, (num_nodes, num_nodes)) > 0.5).astype(
        jnp.float32
    )
    raw_adj = raw_adj * (1.0 - jnp.eye(num_nodes, dtype=jnp.float32))
    deg = jnp.maximum(raw_adj.sum(axis=1, keepdims=True), 1.0)
    adj_mx = raw_adj / deg                                           # (N, N)

    feats = jax.random.normal(k_feats, (num_nodes, num_feats), jnp.float32)
    weight, bias = init_graph_conv_params(k_params, num_feats, num_embeds)

    out = graph_convolution(adj_mx, feats, weight, bias)
    out = jax.block_until_ready(out)

    # Reference check against plain JAX (same math as the PyTorch forward).
    ax_ref = adj_mx @ feats
    ref = jnp.concatenate([feats, ax_ref], axis=1) @ weight + bias
    assert out.shape == (num_nodes, num_embeds)
    assert jnp.allclose(out, ref, atol=1e-5, rtol=1e-5)

    print("KERNEL_OK")
</pallas_src>

<mosaic_0001>
module attributes {stable_mosaic.version = 11 : i64} {
  func.func @_gcn_kernel(%arg0: i32, %arg1: i32, %arg2: memref<128x128xf32, #tpu.memory_space<vmem>>, %arg3: memref<128x128xf32, #tpu.memory_space<vmem>>, %arg4: memref<128x128xf32, #tpu.memory_space<vmem>>, %arg5: memref<128x128xf32, #tpu.memory_space<vmem>>, %arg6: memref<128x128xf32, #tpu.memory_space<vmem>>, %arg7: memref<1x128xf32, #tpu.memory_space<vmem>>, %arg8: memref<128x128xf32, #tpu.memory_space<vmem>>, %arg9: memref<128x128xf32, #tpu.memory_space<vmem>>) attributes {dimension_semantics = [#tpu.dimension_semantics<parallel>, #tpu.dimension_semantics<arbitrary>], iteration_bounds = array<i64: 1, 1>, scalar_prefetch = 0 : i64, scratch_operands = 1 : i64, tpu.core_type = #tpu.core_type<tc>, window_params = [{transform_indices = @transform_0, window_bounds = array<i64: 128, 128>}, {transform_indices = @transform_1, window_bounds = array<i64: 128, 128>}, {transform_indices = @transform_2, window_bounds = array<i64: 128, 128>}, {pipeline_mode = #tpu.pipeline_mode<synchronous>, transform_indices = @transform_3, window_bounds = array<i64: 128, 128>}, {pipeline_mode = #tpu.pipeline_mode<synchronous>, transform_indices = @transform_4, window_bounds = array<i64: 128, 128>}, {pipeline_mode = #tpu.pipeline_mode<synchronous>, transform_indices = @transform_5, window_bounds = array<i64: 1, 128>}, {transform_indices = @transform_6, window_bounds = array<i64: 128, 128>}]} {
    %c0_i32 = arith.constant 0 : i32
    %0 = arith.cmpi eq, %arg1, %c0_i32 : i32
    %1 = arith.extui %0 : i1 to i32
    %c0_i32_0 = arith.constant 0 : i32
    %2 = arith.cmpi ne, %1, %c0_i32_0 : i32
    scf.if %2 {
      %cst_10 = arith.constant 0.000000e+00 : f32
      %12 = vector.broadcast %cst_10 : f32 to vector<128x128xf32>
      %c0_11 = arith.constant 0 : index
      %c0_12 = arith.constant 0 : index
      %13 = vector.load %arg9[%c0_11, %c0_12] : memref<128x128xf32, #tpu.memory_space<vmem>>, vector<128x128xf32>
      tpu.vector_store %arg9[%c0_11, %c0_12], %12 {strides = array<i32>} : memref<128x128xf32, #tpu.memory_space<vmem>>, vector<128x128xf32>,
    } else {
    }
    %c0 = arith.constant 0 : index
    %c0_1 = arith.constant 0 : index
    %3 = vector.load %arg9[%c0, %c0_1] : memref<128x128xf32, #tpu.memory_space<vmem>>, vector<128x128xf32>
    %c0_2 = arith.constant 0 : index
    %c0_3 = arith.constant 0 : index
    %4 = vector.load %arg2[%c0_2, %c0_3] : memref<128x128xf32, #tpu.memory_space<vmem>>, vector<128x128xf32>
    %c0_4 = arith.constant 0 : index
    %c0_5 = arith.constant 0 : index
    %5 = vector.load %arg3[%c0_4, %c0_5] : memref<128x128xf32, #tpu.memory_space<vmem>>, vector<128x128xf32>
    %cst = arith.constant dense<0.000000e+00> : vector<128x128xf32>
    %6 = tpu.matmul %4, %5, %cst {dimension_numbers = #tpu.dot_dimension_numbers<[1], [0], [0], [1], [0, 0, 1, 1], [], []>} : vector<128x128xf32>, vector<128x128xf32>, vector<128x128xf32> -> vector<128x128xf32>
    %7 = arith.addf %3, %6 : vector<128x128xf32>
    %c0_6 = arith.constant 0 : index
    %c0_7 = arith.constant 0 : index
    %8 = vector.load %arg9[%c0_6, %c0_7] : memref<128x128xf32, #tpu.memory_space<vmem>>, vector<128x128xf32>
    tpu.vector_store %arg9[%c0_6, %c0_7], %7 {strides = array<i32>} : memref<128x128xf32, #tpu.memory_space<vmem>>, vector<128x128xf32>,
    %c0_i32_8 = arith.constant 0 : i32
    %9 = arith.cmpi eq, %arg1, %c0_i32_8 : i32
    %10 = arith.extui %9 : i1 to i32
    %c0_i32_9 = arith.constant 0 : i32
    %11 = arith.cmpi ne, %10, %c0_i32_9 : i32
    scf.if %11 {
      %c0_10 = arith.constant 0 : index
      %c0_11 = arith.constant 0 : index
      %12 = vector.load %arg4[%c0_10, %c0_11] : memref<128x128xf32, #tpu.memory_space<vmem>>, vector<128x128xf32>
      %c0_12 = arith.constant 0 : index
      %c0_13 = arith.constant 0 : index
      %13 = vector.load %arg5[%c0_12, %c0_13] : memref<128x128xf32, #tpu.memory_space<vmem>>, vector<128x128xf32>
      %cst_14 = arith.constant dense<0.000000e+00> : vector<128x128xf32>
      %14 = tpu.matmul %12, %13, %cst_14 {dimension_numbers = #tpu.dot_dimension_numbers<[1], [0], [0], [1], [0, 0, 1, 1], [], []>} : vector<128x128xf32>, vector<128x128xf32>, vector<128x128xf32> -> vector<128x128xf32>
      %c0_15 = arith.constant 0 : index
      %c0_16 = arith.constant 0 : index
      %15 = vector.load %arg9[%c0_15, %c0_16] : memref<128x128xf32, #tpu.memory_space<vmem>>, vector<128x128xf32>
      %c0_17 = arith.constant 0 : index
      %c0_18 = arith.constant 0 : index
      %16 = vector.load %arg6[%c0_17, %c0_18] : memref<128x128xf32, #tpu.memory_space<vmem>>, vector<128x128xf32>
      %cst_19 = arith.constant dense<0.000000e+00> : vector<128x128xf32>
      %17 = tpu.matmul %15, %16, %cst_19 {dimension_numbers = #tpu.dot_dimension_numbers<[1], [0], [0], [1], [0, 0, 1, 1], [], []>} : vector<128x128xf32>, vector<128x128xf32>, vector<128x128xf32> -> vector<128x128xf32>
      %18 = arith.addf %14, %17 : vector<128x128xf32>
      %c0_20 = arith.constant 0 : index
      %c0_21 = arith.constant 0 : index
      %19 = vector.load %arg7[%c0_20, %c0_21] : memref<1x128xf32, #tpu.memory_space<vmem>>, vector<1x128xf32>
      %20 = vector.broadcast %19 : vector<1x128xf32> to vector<128x128xf32>
      %21 = arith.addf %18, %20 : vector<128x128xf32>
      %c0_22 = arith.constant 0 : index
      %c0_23 = arith.constant 0 : index
      %22 = vector.load %arg8[%c0_22, %c0_23] : memref<128x128xf32, #tpu.memory_space<vmem>>, vector<128x128xf32>
      tpu.vector_store %arg8[%c0_22, %c0_23], %21 {strides = array<i32>} : memref<128x128xf32, #tpu.memory_space<vmem>>, vector<128x128xf32>,
    } else {
    }
    return
  }
  func.func @transform_0(%arg0: i32, %arg1: i32) -> (i32, i32) {
    %c0_i32 = arith.constant 0 : i32
    return %arg0, %arg1 : i32, i32
  }
  func.func @transform_1(%arg0: i32, %arg1: i32) -> (i32, i32) {
    %c0_i32 = arith.constant 0 : i32
    %c0_i32_0 = arith.constant 0 : i32
    return %arg1, %c0_i32 : i32, i32
  }
  func.func @transform_2(%arg0: i32, %arg1: i32) -> (i32, i32) {
    %c0_i32 = arith.constant 0 : i32
    %c0_i32_0 = arith.constant 0 : i32
    return %arg0, %c0_i32 : i32, i32
  }
  func.func @transform_3(%arg0: i32, %arg1: i32) -> (i32, i32) {
    %c0_i32 = arith.constant 0 : i32
    %c0_i32_0 = arith.constant 0 : i32
    %c0_i32_1 = arith.constant 0 : i32
    return %c0_i32, %c0_i32_0 : i32, i32
  }
  func.func @transform_4(%arg0: i32, %arg1: i32) -> (i32, i32) {
    %c0_i32 = arith.constant 0 : i32
    %c0_i32_0 = arith.constant 0 : i32
    %c0_i32_1 = arith.constant 0 : i32
    return %c0_i32, %c0_i32_0 : i32, i32
  }
  func.func @transform_5(%arg0: i32, %arg1: i32) -> (i32, i32) {
    %c0_i32 = arith.constant 0 : i32
    %c0_i32_0 = arith.constant 0 : i32
    %c0_i32_1 = arith.constant 0 : i32
    return %c0_i32, %c0_i32_0 : i32, i32
  }
  func.func @transform_6(%arg0: i32, %arg1: i32) -> (i32, i32) {
    %c0_i32 = arith.constant 0 : i32
    %c0_i32_0 = arith.constant 0 : i32
    return %arg0, %c0_i32 : i32, i32
  }
}

</mosaic_0001>

<llo_original>
// kernel: tpu_custom_call.1
$region0: #{tpu_custom_call.1}
  #allocation0 [shape = 'u32[]', space=smem, size = 0x4, offset = 0x4, fixed_abs, tag = 'smem constant byte address 0x4 - core index']
  #allocation1 [shape = 'u32[144,128]{1,0:T(1,128)}', space=vmem, size = 0x12000, scoped, tag = 'internal scratch']
  #allocation2 [shape = 'f32[128,128]{1,0:T(8,128)}', space=vmem, size = 0x10000, scoped, tag = 'scratch operand']
  %s0 = inlined_call_operand.hbm [shape: f32[128,128], index: 0, kind: input, shape index: {}]
  %s1 = inlined_call_operand.hbm [shape: f32[128,128], index: 1, kind: input, shape index: {}]
  %s2 = inlined_call_operand.hbm [shape: f32[128,128], index: 2, kind: input, shape index: {}]
  %s3 = inlined_call_operand.hbm [shape: f32[128,128], index: 3, kind: input, shape index: {}]
  %s4 = inlined_call_operand.hbm [shape: f32[128,128], index: 4, kind: input, shape index: {}]
  %s5 = inlined_call_operand.vmem [shape: f32[1,128], index: 5, kind: input, shape index: {}]
  %s6 = inlined_call_operand.hbm [shape: f32[128,128], index: 6, kind: output, shape index: {}]
  %s7 = sld [smem:[#allocation0]]
  $region62: #{tpu_custom_call.1} parent=0
    _
  %s9 = ssub.s32 1, %s7
  %s10 = scalar_select 0, %s9, %s7
  $region1: #{tpu_custom_call.1} parent=0
    #allocation3 [shape = 'u8[65536]{0}', space=vmem, size = 0x10000, scoped, tag = 'input window, operand 0, single buffered']
    #allocation4 [shape = 's32[1]{0}', space=sflag, size = 0x4, scoped, tag = 'scoped memory for tpu_custom_call.1']
    #allocation5 [shape = 's32[1]{0}', space=sflag, size = 0x4, scoped, tag = 'scoped memory for tpu_custom_call.1']
    #allocation6 [shape = 'u8[65536]{0}', space=vmem, size = 0x10000, scoped, tag = 'input window, operand 1, single buffered']
    #allocation7 [shape = 's32[1]{0}', space=sflag, size = 0x4, scoped, tag = 'scoped memory for tpu_custom_call.1']
    #allocation8 [shape = 'u8[65536]{0}', space=vmem, size = 0x10000, scoped, tag = 'input window, operand 2, single buffered']
    #allocation9 [shape = 'u8[65536]{0}', space=vmem, size = 0x10000, scoped, tag = 'input window, operand 3, single buffered']
    #allocation10 [shape = 's32[1]{0}', space=sflag, size = 0x4, scoped, tag = 'scoped memory for tpu_custom_call.1']
    #allocation11 [shape = 'u8[65536]{0}', space=vmem, size = 0x10000, scoped, tag = 'input window, operand 4, single buffered']
    #allocation12 [shape = 'u8[65536]{0}', space=vmem, size = 0x10000, scoped, tag = 'output window, operand 0, single buffered']
    %11 = vsyncpa [#allocation4], 0
    %12 = vsyncpa [#allocation7], 0
    %13 = vsyncpa [#allocation10], 0
    %14 = vsyncpa [#allocation5], 0
    // Predicated region
    $region2: #{tpu_custom_call.1} parent=1 // pred_check
      _
    $region3: #{tpu_custom_call.1} parent=1 // pred_check_branch
      %16 = sbr.rel (0) target = $region5
    $region4: #{tpu_custom_call.1} parent=1 // pred_region
      %s18 = ssub.s32 2048, 2048
      %19 = vsyncadd [#allocation4], %s18
      %s20 = sshll.u32 [#allocation3], 4
      %s21 = int_to_ptr.vmem [resolvable:$true] %s20
      %26 = dma.hbm_to_vmem [thread:$0]  %s0, 2048, %s21, [#allocation4], 128, 128, 8
    $region5: #{tpu_custom_call.1} parent=1 // pred_fallthru
      _
    // Predicated region
    $region6: #{tpu_custom_call.1} parent=1 // pred_check
      _
    $region7: #{tpu_custom_call.1} parent=1 // pred_check_branch
      %28 = sbr.rel (0) target = $region9
    $region8: #{tpu_custom_call.1} parent=1 // pred_region
      %s30 = ssub.s32 2048, 2048
      %31 = vsyncadd [#allocation7], %s30
      %s32 = sshll.u32 [#allocation6], 4
      %s33 = int_to_ptr.vmem [resolvable:$true] %s32
      %38 = dma.hbm_to_vmem [thread:$0]  %s1, 2048, %s33, [#allocation7], 128, 128, 8
    $region9: #{tpu_custom_call.1} parent=1 // pred_fallthru
      _
    // Predicated region
    $region10: #{tpu_custom_call.1} parent=1 // pred_check
      _
    $region11: #{tpu_custom_call.1} parent=1 // pred_check_branch
      %40 = sbr.rel (0) target = $region13
    $region12: #{tpu_custom_call.1} parent=1 // pred_region
      %s42 = ssub.s32 2048, 2048
      %43 = vsyncadd [#allocation7], %s42
      %s44 = sshll.u32 [#allocation8], 4
      %s45 = int_to_ptr.vmem [resolvable:$true] %s44
      %50 = dma.hbm_to_vmem [thread:$0]  %s2, 2048, %s45, [#allocation7], 128, 128, 8
    $region13: #{tpu_custom_call.1} parent=1 // pred_fallthru
      _
    // Predicated region
    $region14: #{tpu_custom_call.1} parent=1 // pred_check
      _
    $region15: #{tpu_custom_call.1} parent=1 // pred_check_branch
      %52 = sbr.rel (0) target = $region17
    $region16: #{tpu_custom_call.1} parent=1 // pred_region
      %s54 = ssub.s32 2048, 2048
      %55 = vsyncadd [#allocation10], %s54
      %s56 = sshll.u32 [#allocation9], 4
      %s57 = int_to_ptr.vmem [resolvable:$true] %s56
      %62 = dma.hbm_to_vmem [thread:$0]  %s3, 2048, %s57, [#allocation10], 128, 128, 8
    $region17: #{tpu_custom_call.1} parent=1 // pred_fallthru
      _
    // Predicated region
    $region18: #{tpu_custom_call.1} parent=1 // pred_check
      _
    $region19: #{tpu_custom_call.1} parent=1 // pred_check_branch
      %64 = sbr.rel (0) target = $region21
    $region20: #{tpu_custom_call.1} parent=1 // pred_region
      %s66 = ssub.s32 2048, 2048
      %67 = vsyncadd [#allocation10], %s66
      %s68 = sshll.u32 [#allocation11], 4
      %s69 = int_to_ptr.vmem [resolvable:$true] %s68
      %74 = dma.hbm_to_vmem [thread:$0]  %s4, 2048, %s69, [#allocation10], 128, 128, 8
    $region21: #{tpu_custom_call.1} parent=1 // pred_fallthru
      _
    // Predicated region
    $region22: #{tpu_custom_call.1} parent=1 // pred_check
      _
    $region23: #{tpu_custom_call.1} parent=1 // pred_check_branch
      %76 = sbr.rel (0) target = $region25
    $region24: #{tpu_custom_call.1} parent=1 // pred_region
      _
    $region25: #{tpu_custom_call.1} parent=1 // pred_fallthru
      _
    // Predicated region
    $region26: #{tpu_custom_call.1} parent=1 // pred_check
      _
    $region27: #{tpu_custom_call.1} parent=1 // pred_check_branch
      %78 = sbr.rel (0) target = $region29
    $region28: #{tpu_custom_call.1} parent=1 // pred_region
      %79 = dma.done [#allocation4], 2048
    $region29: #{tpu_custom_call.1} parent=1 // pred_fallthru
      _
    // Predicated region
    $region30: #{tpu_custom_call.1} parent=1 // pred_check
      _
    $region31: #{tpu_custom_call.1} parent=1 // pred_check_branch
      %81 = sbr.rel (0) target = $region33
    $region32: #{tpu_custom_call.1} parent=1 // pred_region
      %82 = dma.done [#allocation7], 2048
    $region33: #{tpu_custom_call.1} parent=1 // pred_fallthru
      _
    // Predicated region
    $region34: #{tpu_custom_call.1} parent=1 // pred_check
      _
    $region35: #{tpu_custom_call.1} parent=1 // pred_check_branch
      %84 = sbr.rel (0) target = $region37
    $region36: #{tpu_custom_call.1} parent=1 // pred_region
      %85 = dma.done [#allocation7], 2048
    $region37: #{tpu_custom_call.1} parent=1 // pred_fallthru
      _
    // Predicated region
    $region38: #{tpu_custom_call.1} parent=1 // pred_check
      _
    $region39: #{tpu_custom_call.1} parent=1 // pred_check_branch
      %87 = sbr.rel (0) target = $region41
    $region40: #{tpu_custom_call.1} parent=1 // pred_region
      %88 = dma.done [#allocation10], 2048
    $region41: #{tpu_custom_call.1} parent=1 // pred_fallthru
      _
    // Predicated region
    $region42: #{tpu_custom_call.1} parent=1 // pred_check
      _
    $region43: #{tpu_custom_call.1} parent=1 // pred_check_branch
      %90 = sbr.rel (0) target = $region45
    $region44: #{tpu_custom_call.1} parent=1 // pred_region
      %91 = dma.done [#allocation10], 2048
    $region45: #{tpu_custom_call.1} parent=1 // pred_fallthru
      _
    %p92 = scmp.eq.s32.totalorder 0, 0
    // Predicated region
    $region46: #{tpu_custom_call.1} parent=1 // pred_check
      %p93 = pneg %p92
    $region47: #{tpu_custom_call.1} parent=1 // pred_check_branch
      %95 = sbr.rel (%p93) target = $region49
    $region48: #{tpu_custom_call.1} parent=1 // pred_region
      %96 = vst [vmem:[#allocation2] sm:$0xff] 0.0
      %97 = vst [vmem:[#allocation2 + $0x8] sm:$0xff] 0.0
      %98 = vst [vmem:[#allocation2 + $0x10] sm:$0xff] 0.0
      %99 = vst [vmem:[#allocation2 + $0x18] sm:$0xff] 0.0
      %100 = vst [vmem:[#allocation2 + $0x20] sm:$0xff] 0.0
      %101 = vst [vmem:[#allocation2 + $0x28] sm:$0xff] 0.0
      %102 = vst [vmem:[#allocation2 + $0x30] sm:$0xff] 0.0
      %103 = vst [vmem:[#allocation2 + $0x38] sm:$0xff] 0.0
      %104 = vst [vmem:[#allocation2 + $0x40] sm:$0xff] 0.0
      %105 = vst [vmem:[#allocation2 + $0x48] sm:$0xff] 0.0
      %106 = vst [vmem:[#allocation2 + $0x50] sm:$0xff] 0.0
      %107 = vst [vmem:[#allocation2 + $0x58] sm:$0xff] 0.0
      %108 = vst [vmem:[#allocation2 + $0x60] sm:$0xff] 0.0
      %109 = vst [vmem:[#allocation2 + $0x68] sm:$0xff] 0.0
      %110 = vst [vmem:[#allocation2 + $0x70] sm:$0xff] 0.0
      %111 = vst [vmem:[#allocation2 + $0x78] sm:$0xff] 0.0
    $region49: #{tpu_custom_call.1} parent=1 // pred_fallthru
      _
    %v112 = vld [vmem:[#allocation2] sm:$0xff]
    %v113 = vld [vmem:[#allocation2 + $0x8] sm:$0xff]
    %v114 = vld [vmem:[#allocation2 + $0x10] sm:$0xff]
    %v115 = vld [vmem:[#allocation2 + $0x18] sm:$0xff]
    %v116 = vld [vmem:[#allocation2 + $0x20] sm:$0xff]
    %v117 = vld [vmem:[#allocation2 + $0x28] sm:$0xff]
    %v118 = vld [vmem:[#allocation2 + $0x30] sm:$0xff]
    %v119 = vld [vmem:[#allocation2 + $0x38] sm:$0xff]
    %v120 = vld [vmem:[#allocation2 + $0x40] sm:$0xff]
    %v121 = vld [vmem:[#allocation2 + $0x48] sm:$0xff]
    %v122 = vld [vmem:[#allocation2 + $0x50] sm:$0xff]
    %v123 = vld [vmem:[#allocation2 + $0x58] sm:$0xff]
    %v124 = vld [vmem:[#allocation2 + $0x60] sm:$0xff]
    %v125 = vld [vmem:[#allocation2 + $0x68] sm:$0xff]
    %v126 = vld [vmem:[#allocation2 + $0x70] sm:$0xff]
    %v127 = vld [vmem:[#allocation2 + $0x78] sm:$0xff]
    %v128 = vld [vmem:[#allocation3] sm:$0xff]
    %v129 = vld [vmem:[#allocation3 + $0x8] sm:$0xff]
    %v130 = vld [vmem:[#allocation3 + $0x10] sm:$0xff]
    %v131 = vld [vmem:[#allocation3 + $0x18] sm:$0xff]
    %v132 = vld [vmem:[#allocation3 + $0x20] sm:$0xff]
    %v133 = vld [vmem:[#allocation3 + $0x28] sm:$0xff]
    %v134 = vld [vmem:[#allocation3 + $0x30] sm:$0xff]
    %v135 = vld [vmem:[#allocation3 + $0x38] sm:$0xff]
    %v136 = vld [vmem:[#allocation3 + $0x40] sm:$0xff]
    %v137 = vld [vmem:[#allocation3 + $0x48] sm:$0xff]
    %v138 = vld [vmem:[#allocation3 + $0x50] sm:$0xff]
    %v139 = vld [vmem:[#allocation3 + $0x58] sm:$0xff]
    %v140 = vld [vmem:[#allocation3 + $0x60] sm:$0xff]
    %v141 = vld [vmem:[#allocation3 + $0x68] sm:$0xff]
    %v142 = vld [vmem:[#allocation3 + $0x70] sm:$0xff]
    %v143 = vld [vmem:[#allocation3 + $0x78] sm:$0xff]
    %v144 = vld [vmem:[#allocation6] sm:$0xff]
    %v145 = vld [vmem:[#allocation6 + $0x8] sm:$0xff]
    %v146 = vld [vmem:[#allocation6 + $0x10] sm:$0xff]
    %v147 = vld [vmem:[#allocation6 + $0x18] sm:$0xff]
    %v148 = vld [vmem:[#allocation6 + $0x20] sm:$0xff]
    %v149 = vld [vmem:[#allocation6 + $0x28] sm:$0xff]
    %v150 = vld [vmem:[#allocation6 + $0x30] sm:$0xff]
    %v151 = vld [vmem:[#allocation6 + $0x38] sm:$0xff]
    %v152 = vld [vmem:[#allocation6 + $0x40] sm:$0xff]
    %v153 = vld [vmem:[#allocation6 + $0x48] sm:$0xff]
    %v154 = vld [vmem:[#allocation6 + $0x50] sm:$0xff]
    %v155 = vld [vmem:[#allocation6 + $0x58] sm:$0xff]
    %v156 = vld [vmem:[#allocation6 + $0x60] sm:$0xff]
    %v157 = vld [vmem:[#allocation6 + $0x68] sm:$0xff]
    %v158 = vld [vmem:[#allocation6 + $0x70] sm:$0xff]
    %v159 = vld [vmem:[#allocation6 + $0x78] sm:$0xff]
    %160 = vmatprep.subr.mxu0 0.0
    %161 = vmatpush1.msra.mxu0 %v144
    %162 = vmatprep.subr.mxu0 0.0
    %163 = vmatpush1.msra.mxu0 %v145
    %164 = vmatprep.subr.mxu0 0.0
    %165 = vmatpush1.msra.mxu0 %v146
    %166 = vmatprep.subr.mxu0 0.0
    %167 = vmatpush1.msra.mxu0 %v147
    %168 = vmatprep.subr.mxu0 0.0
    %169 = vmatpush1.msra.mxu0 %v148
    %170 = vmatprep.subr.mxu0 0.0
    %171 = vmatpush1.msra.mxu0 %v149
    %172 = vmatprep.subr.mxu0 0.0
    %173 = vmatpush1.msra.mxu0 %v150
    %174 = vmatprep.subr.mxu0 0.0
    %175 = vmatpush1.msra.mxu0 %v151
    %176 = vmatprep.subr.mxu0 0.0
    %177 = vmatpush1.msra.mxu0 %v152
    %178 = vmatprep.subr.mxu0 0.0
    %179 = vmatpush1.msra.mxu0 %v153
    %180 = vmatprep.subr.mxu0 0.0
    %181 = vmatpush1.msra.mxu0 %v154
    %182 = vmatprep.subr.mxu0 0.0
    %183 = vmatpush1.msra.mxu0 %v155
    %184 = vmatprep.subr.mxu0 0.0
    %185 = vmatpush1.msra.mxu0 %v156
    %186 = vmatprep.subr.mxu0 0.0
    %187 = vmatpush1.msra.mxu0 %v157
    %188 = vmatprep.subr.mxu0 0.0
    %189 = vmatpush1.msra.mxu0 %v158
    %190 = vmatprep.subr.mxu0 0.0
    %191 = vmatpush1.msra.mxu0 %v159
    %192 = vmatprep.subr.mxu0 0.0
    %193 = vmatpush1.msra.mxu0 0.0
    %194 = vmatprep.subr.mxu0 0.0
    %195 = vmatpush1.msra.mxu0 0.0
    %196 = vmatprep.subr.mxu0 0.0
    %197 = vmatpush1.msra.mxu0 0.0
    %198 = vmatprep.subr.mxu0 0.0
    %199 = vmatpush1.msra.mxu0 0.0
    %200 = vmatprep.subr.mxu0 0.0
    %201 = vmatpush1.msra.mxu0 0.0
    %202 = vmatprep.subr.mxu0 0.0
    %203 = vmatpush1.msra.mxu0 0.0
    %204 = vmatprep.subr.mxu0 0.0
    %205 = vmatpush1.msra.mxu0 0.0
    %206 = vmatprep.subr.mxu0 0.0
    %207 = vmatpush1.msra.mxu0 0.0
    %208 = vmatprep.subr.mxu0 0.0
    %209 = vmatpush1.msra.mxu0 0.0
    %210 = vmatprep.subr.mxu0 0.0
    %211 = vmatpush1.msra.mxu0 0.0
    %212 = vmatprep.subr.mxu0 0.0
    %213 = vmatpush1.msra.mxu0 0.0
    %214 = vmatprep.subr.mxu0 0.0
    %215 = vmatpush1.msra.mxu0 0.0
    %216 = vmatprep.subr.mxu0 0.0
    %217 = vmatpush1.msra.mxu0 0.0
    %218 = vmatprep.subr.mxu0 0.0
    %219 = vmatpush1.msra.mxu0 0.0
    %220 = vmatprep.subr.mxu0 0.0
    %221 = vmatpush1.msra.mxu0 0.0
    %222 = vmatprep.subr.mxu0 0.0
    %223 = vmatpush1.msra.mxu0 0.0
    %224 = vmatprep.mubr.f32.mxu0 0.0
    %225 = vmatmul.mubr.f32.gmra.mrb[0].mxu0 %v128
    %v226 = vpop.f32.mrb[0].mxu0
    %v227 = vadd.f32 0.0, %v226
    %v228 = vpop.f32.mrb[0].mxu0
    %229 = vmatprep.mubr.f32.mxu0 0.0
    %230 = vmatmul.mubr.f32.gmra.mrb[0].mxu0 %v129
    %v231 = vpop.f32.mrb[0].mxu0
    %v232 = vadd.f32 0.0, %v231
    %v233 = vpop.f32.mrb[0].mxu0
    %234 = vmatprep.mubr.f32.mxu0 0.0
    %235 = vmatmul.mubr.f32.gmra.mrb[0].mxu0 %v130
    %v236 = vpop.f32.mrb[0].mxu0
    %v237 = vadd.f32 0.0, %v236
    %v238 = vpop.f32.mrb[0].mxu0
    %239 = vmatprep.mubr.f32.mxu0 0.0
    %240 = vmatmul.mubr.f32.gmra.mrb[0].mxu0 %v131
    %v241 = vpop.f32.mrb[0].mxu0
    %v242 = vadd.f32 0.0, %v241
    %v243 = vpop.f32.mrb[0].mxu0
    %244 = vmatprep.mubr.f32.mxu0 0.0
    %245 = vmatmul.mubr.f32.gmra.mrb[0].mxu0 %v132
    %v246 = vpop.f32.mrb[0].mxu0
    %v247 = vadd.f32 0.0, %v246
    %v248 = vpop.f32.mrb[0].mxu0
    %249 = vmatprep.mubr.f32.mxu0 0.0
    %250 = vmatmul.mubr.f32.gmra.mrb[0].mxu0 %v133
    %v251 = vpop.f32.mrb[0].mxu0
    %v252 = vadd.f32 0.0, %v251
    %v253 = vpop.f32.mrb[0].mxu0
    %254 = vmatprep.mubr.f32.mxu0 0.0
    %255 = vmatmul.mubr.f32.gmra.mrb[0].mxu0 %v134
    %v256 = vpop.f32.mrb[0].mxu0
    %v257 = vadd.f32 0.0, %v256
    %v258 = vpop.f32.mrb[0].mxu0
    %259 = vmatprep.mubr.f32.mxu0 0.0
    %260 = vmatmul.mubr.f32.gmra.mrb[0].mxu0 %v135
    %v261 = vpop.f32.mrb[0].mxu0
    %v262 = vadd.f32 0.0, %v261
    %v263 = vpop.f32.mrb[0].mxu0
    %264 = vmatprep.mubr.f32.mxu0 0.0
    %265 = vmatmul.mubr.f32.gmra.mrb[0].mxu0 %v136
    %v266 = vpop.f32.mrb[0].mxu0
    %v267 = vadd.f32 0.0, %v266
    %v268 = vpop.f32.mrb[0].mxu0
    %269 = vmatprep.mubr.f32.mxu0 0.0
    %270 = vmatmul.mubr.f32.gmra.mrb[0].mxu0 %v137
    %v271 = vpop.f32.mrb[0].mxu0
    %v272 = vadd.f32 0.0, %v271
    %v273 = vpop.f32.mrb[0].mxu0
    %274 = vmatprep.mubr.f32.mxu0 0.0
    %275 = vmatmul.mubr.f32.gmra.mrb[0].mxu0 %v138
    %v276 = vpop.f32.mrb[0].mxu0
    %v277 = vadd.f32 0.0, %v276
    %v278 = vpop.f32.mrb[0].mxu0
    %279 = vmatprep.mubr.f32.mxu0 0.0
    %280 = vmatmul.mubr.f32.gmra.mrb[0].mxu0 %v139
    %v281 = vpop.f32.mrb[0].mxu0
    %v282 = vadd.f32 0.0, %v281
    %v283 = vpop.f32.mrb[0].mxu0
    %284 = vmatprep.mubr.f32.mxu0 0.0
    %285 = vmatmul.mubr.f32.gmra.mrb[0].mxu0 %v140
    %v286 = vpop.f32.mrb[0].mxu0
    %v287 = vadd.f32 0.0, %v286
    %v288 = vpop.f32.mrb[0].mxu0
    %289 = vmatprep.mubr.f32.mxu0 0.0
    %290 = vmatmul.mubr.f32.gmra.mrb[0].mxu0 %v141
    %v291 = vpop.f32.mrb[0].mxu0
    %v292 = vadd.f32 0.0, %v291
    %v293 = vpop.f32.mrb[0].mxu0
    %294 = vmatprep.mubr.f32.mxu0 0.0
    %295 = vmatmul.mubr.f32.gmra.mrb[0].mxu0 %v142
    %v296 = vpop.f32.mrb[0].mxu0
    %v297 = vadd.f32 0.0, %v296
    %v298 = vpop.f32.mrb[0].mxu0
    %299 = vmatprep.mubr.f32.mxu0 0.0
    %300 = vmatmul.mubr.f32.gmra.mrb[0].mxu0 %v143
    %v301 = vpop.f32.mrb[0].mxu0
    %v302 = vadd.f32 0.0, %v301
    %v303 = vpop.f32.mrb[0].mxu0
    %304 = vdwg.mxu0
    %v305 = vadd.f32 %v112, %v227
    %v306 = vadd.f32 %v113, %v232
    %v307 = vadd.f32 %v114, %v237
    %v308 = vadd.f32 %v115, %v242
    %v309 = vadd.f32 %v116, %v247
    %v310 = vadd.f32 %v117, %v252
    %v311 = vadd.f32 %v118, %v257
    %v312 = vadd.f32 %v119, %v262
    %v313 = vadd.f32 %v120, %v267
    %v314 = vadd.f32 %v121, %v272
    %v315 = vadd.f32 %v122, %v277
    %v316 = vadd.f32 %v123, %v282
    %v317 = vadd.f32 %v124, %v287
    %v318 = vadd.f32 %v125, %v292
    %v319 = vadd.f32 %v126, %v297
    %v320 = vadd.f32 %v127, %v302
    %321 = vst [vmem:[#allocation2] sm:$0xff] %v305
    %322 = vst [vmem:[#allocation2 + $0x8] sm:$0xff] %v306
    %323 = vst [vmem:[#allocation2 + $0x10] sm:$0xff] %v307
    %324 = vst [vmem:[#allocation2 + $0x18] sm:$0xff] %v308
    %325 = vst [vmem:[#allocation2 + $0x20] sm:$0xff] %v309
    %326 = vst [vmem:[#allocation2 + $0x28] sm:$0xff] %v310
    %327 = vst [vmem:[#allocation2 + $0x30] sm:$0xff] %v311
    %328 = vst [vmem:[#allocation2 + $0x38] sm:$0xff] %v312
    %329 = vst [vmem:[#allocation2 + $0x40] sm:$0xff] %v313
    %330 = vst [vmem:[#allocation2 + $0x48] sm:$0xff] %v314
    %331 = vst [vmem:[#allocation2 + $0x50] sm:$0xff] %v315
    %332 = vst [vmem:[#allocation2 + $0x58] sm:$0xff] %v316
    %333 = vst [vmem:[#allocation2 + $0x60] sm:$0xff] %v317
    %334 = vst [vmem:[#allocation2 + $0x68] sm:$0xff] %v318
    %335 = vst [vmem:[#allocation2 + $0x70] sm:$0xff] %v319
    %336 = vst [vmem:[#allocation2 + $0x78] sm:$0xff] %v320
    // Predicated region
    $region50: #{tpu_custom_call.1} parent=1 // pred_check
      %p337 = pneg %p92
    $region51: #{tpu_custom_call.1} parent=1 // pred_check_branch
      %339 = sbr.rel (%p337) target = $region53
    $region52: #{tpu_custom_call.1} parent=1 // pred_region
      %v340 = vld [vmem:[#allocation8] sm:$0xff]
      %v341 = vld [vmem:[#allocation8 + $0x8] sm:$0xff]
      %v342 = vld [vmem:[#allocation8 + $0x10] sm:$0xff]
      %v343 = vld [vmem:[#allocation8 + $0x18] sm:$0xff]
      %v344 = vld [vmem:[#allocation8 + $0x20] sm:$0xff]
      %v345 = vld [vmem:[#allocation8 + $0x28] sm:$0xff]
      %v346 = vld [vmem:[#allocation8 + $0x30] sm:$0xff]
      %v347 = vld [vmem:[#allocation8 + $0x38] sm:$0xff]
      %v348 = vld [vmem:[#allocation8 + $0x40] sm:$0xff]
      %v349 = vld [vmem:[#allocation8 + $0x48] sm:$0xff]
      %v350 = vld [vmem:[#allocation8 + $0x50] sm:$0xff]
      %v351 = vld [vmem:[#allocation8 + $0x58] sm:$0xff]
      %v352 = vld [vmem:[#allocation8 + $0x60] sm:$0xff]
      %v353 = vld [vmem:[#allocation8 + $0x68] sm:$0xff]
      %v354 = vld [vmem:[#allocation8 + $0x70] sm:$0xff]
      %v355 = vld [vmem:[#allocation8 + $0x78] sm:$0xff]
      %v356 = vld [vmem:[#allocation9] sm:$0xff]
      %v357 = vld [vmem:[#allocation9 + $0x8] sm:$0xff]
      %v358 = vld [vmem:[#allocation9 + $0x10] sm:$0xff]
      %v359 = vld [vmem:[#allocation9 + $0x18] sm:$0xff]
      %v360 = vld [vmem:[#allocation9 + $0x20] sm:$0xff]
      %v361 = vld [vmem:[#allocation9 + $0x28] sm:$0xff]
      %v362 = vld [vmem:[#allocation9 + $0x30] sm:$0xff]
      %v363 = vld [vmem:[#allocation9 + $0x38] sm:$0xff]
      %v364 = vld [vmem:[#allocation9 + $0x40] sm:$0xff]
      %v365 = vld [vmem:[#allocation9 + $0x48] sm:$0xff]
      %v366 = vld [vmem:[#allocation9 + $0x50] sm:$0xff]
      %v367 = vld [vmem:[#allocation9 + $0x58] sm:$0xff]
      %v368 = vld [vmem:[#allocation9 + $0x60] sm:$0xff]
      %v369 = vld [vmem:[#allocation9 + $0x68] sm:$0xff]
      %v370 = vld [vmem:[#allocation9 + $0x70] sm:$0xff]
      %v371 = vld [vmem:[#allocation9 + $0x78] sm:$0xff]
      %v372 = vld [vmem:[#allocation2] sm:$0xff]
      %v373 = vld [vmem:[#allocation2 + $0x8] sm:$0xff]
      %v374 = vld [vmem:[#allocation2 + $0x10] sm:$0xff]
      %v375 = vld [vmem:[#allocation2 + $0x18] sm:$0xff]
      %v376 = vld [vmem:[#allocation2 + $0x20] sm:$0xff]
      %v377 = vld [vmem:[#allocation2 + $0x28] sm:$0xff]
      %v378 = vld [vmem:[#allocation2 + $0x30] sm:$0xff]
      %v379 = vld [vmem:[#allocation2 + $0x38] sm:$0xff]
      %v380 = vld [vmem:[#allocation2 + $0x40] sm:$0xff]
      %v381 = vld [vmem:[#allocation2 + $0x48] sm:$0xff]
      %v382 = vld [vmem:[#allocation2 + $0x50] sm:$0xff]
      %v383 = vld [vmem:[#allocation2 + $0x58] sm:$0xff]
      %v384 = vld [vmem:[#allocation2 + $0x60] sm:$0xff]
      %v385 = vld [vmem:[#allocation2 + $0x68] sm:$0xff]
      %v386 = vld [vmem:[#allocation2 + $0x70] sm:$0xff]
      %v387 = vld [vmem:[#allocation2 + $0x78] sm:$0xff]
      %v388 = vld [vmem:[#allocation11] sm:$0xff]
      %v389 = vld [vmem:[#allocation11 + $0x8] sm:$0xff]
      %v390 = vld [vmem:[#allocation11 + $0x10] sm:$0xff]
      %v391 = vld [vmem:[#allocation11 + $0x18] sm:$0xff]
      %v392 = vld [vmem:[#allocation11 + $0x20] sm:$0xff]
      %v393 = vld [vmem:[#allocation11 + $0x28] sm:$0xff]
      %v394 = vld [vmem:[#allocation11 + $0x30] sm:$0xff]
      %v395 = vld [vmem:[#allocation11 + $0x38] sm:$0xff]
      %v396 = vld [vmem:[#allocation11 + $0x40] sm:$0xff]
      %v397 = vld [vmem:[#allocation11 + $0x48] sm:$0xff]
      %v398 = vld [vmem:[#allocation11 + $0x50] sm:$0xff]
      %v399 = vld [vmem:[#allocation11 + $0x58] sm:$0xff]
      %v400 = vld [vmem:[#allocation11 + $0x60] sm:$0xff]
      %v401 = vld [vmem:[#allocation11 + $0x68] sm:$0xff]
      %v402 = vld [vmem:[#allocation11 + $0x70] sm:$0xff]
      %v403 = vld [vmem:[#allocation11 + $0x78] sm:$0xff]
      %404 = vmatprep.subr.mxu0 0.0
      %405 = vmatpush1.msra.mxu0 %v388
      %406 = vmatprep.subr.mxu0 0.0
      %407 = vmatpush1.msra.mxu0 %v389
      %408 = vmatprep.subr.mxu0 0.0
      %409 = vmatpush1.msra.mxu0 %v390
      %410 = vmatprep.subr.mxu0 0.0
      %411 = vmatpush1.msra.mxu0 %v391
      %412 = vmatprep.subr.mxu0 0.0
      %413 = vmatpush1.msra.mxu0 %v392
      %414 = vmatprep.subr.mxu0 0.0
      %415 = vmatpush1.msra.mxu0 %v393
      %416 = vmatprep.subr.mxu0 0.0
      %417 = vmatpush1.msra.mxu0 %v394
      %418 = vmatprep.subr.mxu0 0.0
      %419 = vmatpush1.msra.mxu0 %v395
      %420 = vmatprep.subr.mxu0 0.0
      %421 = vmatpush1.msra.mxu0 %v396
      %422 = vmatprep.subr.mxu0 0.0
      %423 = vmatpush1.msra.mxu0 %v397
      %424 = vmatprep.subr.mxu0 0.0
      %425 = vmatpush1.msra.mxu0 %v398
      %426 = vmatprep.subr.mxu0 0.0
      %427 = vmatpush1.msra.mxu0 %v399
      %428 = vmatprep.subr.mxu0 0.0
      %429 = vmatpush1.msra.mxu0 %v400
      %430 = vmatprep.subr.mxu0 0.0
      %431 = vmatpush1.msra.mxu0 %v401
      %432 = vmatprep.subr.mxu0 0.0
      %433 = vmatpush1.msra.mxu0 %v402
      %434 = vmatprep.subr.mxu0 0.0
      %435 = vmatpush1.msra.mxu0 %v403
      %436 = vmatprep.subr.mxu0 0.0
      %437 = vmatpush1.msra.mxu0 0.0
      %438 = vmatprep.subr.mxu0 0.0
      %439 = vmatpush1.msra.mxu0 0.0
      %440 = vmatprep.subr.mxu0 0.0
      %441 = vmatpush1.msra.mxu0 0.0
      %442 = vmatprep.subr.mxu0 0.0
      %443 = vmatpush1.msra.mxu0 0.0
      %444 = vmatprep.subr.mxu0 0.0
      %445 = vmatpush1.msra.mxu0 0.0
      %446 = vmatprep.subr.mxu0 0.0
      %447 = vmatpush1.msra.mxu0 0.0
      %448 = vmatprep.subr.mxu0 0.0
      %449 = vmatpush1.msra.mxu0 0.0
      %450 = vmatprep.subr.mxu0 0.0
      %451 = vmatpush1.msra.mxu0 0.0
      %452 = vmatprep.subr.mxu0 0.0
      %453 = vmatpush1.msra.mxu0 0.0
      %454 = vmatprep.subr.mxu0 0.0
      %455 = vmatpush1.msra.mxu0 0.0
      %456 = vmatprep.subr.mxu0 0.0
      %457 = vmatpush1.msra.mxu0 0.0
      %458 = vmatprep.subr.mxu0 0.0
      %459 = vmatpush1.msra.mxu0 0.0
      %460 = vmatprep.subr.mxu0 0.0
      %461 = vmatpush1.msra.mxu0 0.0
      %462 = vmatprep.subr.mxu0 0.0
      %463 = vmatpush1.msra.mxu0 0.0
      %464 = vmatprep.subr.mxu0 0.0
      %465 = vmatpush1.msra.mxu0 0.0
      %466 = vmatprep.subr.mxu0 0.0
      %467 = vmatpush1.msra.mxu0 0.0
      %468 = vmatprep.mubr.f32.mxu0 0.0
      %469 = vmatmul.mubr.f32.gmra.mrb[0].mxu0 %v372
      %v470 = vpop.f32.mrb[0].mxu0
      %v471 = vadd.f32 0.0, %v470
      %v472 = vpop.f32.mrb[0].mxu0
      %473 = vmatprep.mubr.f32.mxu0 0.0
      %474 = vmatmul.mubr.f32.gmra.mrb[0].mxu0 %v373
      %v475 = vpop.f32.mrb[0].mxu0
      %v476 = vadd.f32 0.0, %v475
      %v477 = vpop.f32.mrb[0].mxu0
      %478 = vmatprep.mubr.f32.mxu0 0.0
      %479 = vmatmul.mubr.f32.gmra.mrb[0].mxu0 %v374
      %v480 = vpop.f32.mrb[0].mxu0
      %v481 = vadd.f32 0.0, %v480
      %v482 = vpop.f32.mrb[0].mxu0
      %483 = vmatprep.mubr.f32.mxu0 0.0
      %484 = vmatmul.mubr.f32.gmra.mrb[0].mxu0 %v375
      %v485 = vpop.f32.mrb[0].mxu0
      %v486 = vadd.f32 0.0, %v485
      %v487 = vpop.f32.mrb[0].mxu0
      %488 = vmatprep.mubr.f32.mxu0 0.0
      %489 = vmatmul.mubr.f32.gmra.mrb[0].mxu0 %v376
      %v490 = vpop.f32.mrb[0].mxu0
      %v491 = vadd.f32 0.0, %v490
      %v492 = vpop.f32.mrb[0].mxu0
      %493 = vmatprep.mubr.f32.mxu0 0.0
      %494 = vmatmul.mubr.f32.gmra.mrb[0].mxu0 %v377
      %v495 = vpop.f32.mrb[0].mxu0
      %v496 = vadd.f32 0.0, %v495
      %v497 = vpop.f32.mrb[0].mxu0
      %498 = vmatprep.mubr.f32.mxu0 0.0
      %499 = vmatmul.mubr.f32.gmra.mrb[0].mxu0 %v378
      %v500 = vpop.f32.mrb[0].mxu0
      %v501 = vadd.f32 0.0, %v500
      %v502 = vpop.f32.mrb[0].mxu0
      %503 = vmatprep.mubr.f32.mxu0 0.0
      %504 = vmatmul.mubr.f32.gmra.mrb[0].mxu0 %v379
      %v505 = vpop.f32.mrb[0].mxu0
      %v506 = vadd.f32 0.0, %v505
      %v507 = vpop.f32.mrb[0].mxu0
      %508 = vmatprep.mubr.f32.mxu0 0.0
      %509 = vmatmul.mubr.f32.gmra.mrb[0].mxu0 %v380
      %v510 = vpop.f32.mrb[0].mxu0
      %v511 = vadd.f32 0.0, %v510
      %v512 = vpop.f32.mrb[0].mxu0
      %513 = vmatprep.mubr.f32.mxu0 0.0
      %514 = vmatmul.mubr.f32.gmra.mrb[0].mxu0 %v381
      %v515 = vpop.f32.mrb[0].mxu0
      %v516 = vadd.f32 0.0, %v515
      %v517 = vpop.f32.mrb[0].mxu0
      %518 = vmatprep.mubr.f32.mxu0 0.0
      %519 = vmatmul.mubr.f32.gmra.mrb[0].mxu0 %v382
      %v520 = vpop.f32.mrb[0].mxu0
      %v521 = vadd.f32 0.0, %v520
      %v522 = vpop.f32.mrb[0].mxu0
      %523 = vmatprep.mubr.f32.mxu0 0.0
      %524 = vmatmul.mubr.f32.gmra.mrb[0].mxu0 %v383
      %v525 = vpop.f32.mrb[0].mxu0
      %v526 = vadd.f32 0.0, %v525
      %v527 = vpop.f32.mrb[0].mxu0
      %528 = vmatprep.mubr.f32.mxu0 0.0
      %529 = vmatmul.mubr.f32.gmra.mrb[0].mxu0 %v384
      %v530 = vpop.f32.mrb[0].mxu0
      %v531 = vadd.f32 0.0, %v530
      %v532 = vpop.f32.mrb[0].mxu0
      %533 = vmatprep.mubr.f32.mxu0 0.0
      %534 = vmatmul.mubr.f32.gmra.mrb[0].mxu0 %v385
      %v535 = vpop.f32.mrb[0].mxu0
      %v536 = vadd.f32 0.0, %v535
      %v537 = vpop.f32.mrb[0].mxu0
      %538 = vmatprep.mubr.f32.mxu0 0.0
      %539 = vmatmul.mubr.f32.gmra.mrb[0].mxu0 %v386
      %v540 = vpop.f32.mrb[0].mxu0
      %v541 = vadd.f32 0.0, %v540
      %v542 = vpop.f32.mrb[0].mxu0
      %543 = vmatprep.mubr.f32.mxu0 0.0
      %544 = vmatmul.mubr.f32.gmra.mrb[0].mxu0 %v387
      %v545 = vpop.f32.mrb[0].mxu0
      %v546 = vadd.f32 0.0, %v545
      %v547 = vpop.f32.mrb[0].mxu0
      %548 = vdwg.mxu0
      %549 = vmatprep.subr.mxu0 0.0
      %550 = vmatpush1.msra.mxu0 %v356
      %551 = vmatprep.subr.mxu0 0.0
      %552 = vmatpush1.msra.mxu0 %v357
      %553 = vmatprep.subr.mxu0 0.0
      %554 = vmatpush1.msra.mxu0 %v358
      %555 = vmatprep.subr.mxu0 0.0
      %556 = vmatpush1.msra.mxu0 %v359
      %557 = vmatprep.subr.mxu0 0.0
      %558 = vmatpush1.msra.mxu0 %v360
      %559 = vmatprep.subr.mxu0 0.0
      %560 = vmatpush1.msra.mxu0 %v361
      %561 = vmatprep.subr.mxu0 0.0
      %562 = vmatpush1.msra.mxu0 %v362
      %563 = vmatprep.subr.mxu0 0.0
      %564 = vmatpush1.msra.mxu0 %v363
      %565 = vmatprep.subr.mxu0 0.0
      %566 = vmatpush1.msra.mxu0 %v364
      %567 = vmatprep.subr.mxu0 0.0
      %568 = vmatpush1.msra.mxu0 %v365
      %569 = vmatprep.subr.mxu0 0.0
      %570 = vmatpush1.msra.mxu0 %v366
      %571 = vmatprep.subr.mxu0 0.0
      %572 = vmatpush1.msra.mxu0 %v367
      %573 = vmatprep.subr.mxu0 0.0
      %574 = vmatpush1.msra.mxu0 %v368
      %575 = vmatprep.subr.mxu0 0.0
      %576 = vmatpush1.msra.mxu0 %v369
      %577 = vmatprep.subr.mxu0 0.0
      %578 = vmatpush1.msra.mxu0 %v370
      %579 = vmatprep.subr.mxu0 0.0
      %580 = vmatpush1.msra.mxu0 %v371
      %581 = vmatprep.subr.mxu0 0.0
      %582 = vmatpush1.msra.mxu0 0.0
      %583 = vmatprep.subr.mxu0 0.0
      %584 = vmatpush1.msra.mxu0 0.0
      %585 = vmatprep.subr.mxu0 0.0
      %586 = vmatpush1.msra.mxu0 0.0
      %587 = vmatprep.subr.mxu0 0.0
      %588 = vmatpush1.msra.mxu0 0.0
      %589 = vmatprep.subr.mxu0 0.0
      %590 = vmatpush1.msra.mxu0 0.0
      %591 = vmatprep.subr.mxu0 0.0
      %592 = vmatpush1.msra.mxu0 0.0
      %593 = vmatprep.subr.mxu0 0.0
      %594 = vmatpush1.msra.mxu0 0.0
      %595 = vmatprep.subr.mxu0 0.0
      %596 = vmatpush1.msra.mxu0 0.0
      %597 = vmatprep.subr.mxu0 0.0
      %598 = vmatpush1.msra.mxu0 0.0
      %599 = vmatprep.subr.mxu0 0.0
      %600 = vmatpush1.msra.mxu0 0.0
      %601 = vmatprep.subr.mxu0 0.0
      %602 = vmatpush1.msra.mxu0 0.0
      %603 = vmatprep.subr.mxu0 0.0
      %604 = vmatpush1.msra.mxu0 0.0
      %605 = vmatprep.subr.mxu0 0.0
      %606 = vmatpush1.msra.mxu0 0.0
      %607 = vmatprep.subr.mxu0 0.0
      %608 = vmatpush1.msra.mxu0 0.0
      %609 = vmatprep.subr.mxu0 0.0
      %610 = vmatpush1.msra.mxu0 0.0
      %611 = vmatprep.subr.mxu0 0.0
      %612 = vmatpush1.msra.mxu0 0.0
      %613 = vmatprep.mubr.f32.mxu0 0.0
      %614 = vmatmul.mubr.f32.gmra.mrb[0].mxu0 %v340
      %v615 = vpop.f32.mrb[0].mxu0
      %v616 = vadd.f32 %v471, %v615
      %v617 = vpop.f32.mrb[0].mxu0
      %618 = vmatprep.mubr.f32.mxu0 0.0
      %619 = vmatmul.mubr.f32.gmra.mrb[0].mxu0 %v341
      %v620 = vpop.f32.mrb[0].mxu0
      %v621 = vadd.f32 %v476, %v620
      %v622 = vpop.f32.mrb[0].mxu0
      %623 = vmatprep.mubr.f32.mxu0 0.0
      %624 = vmatmul.mubr.f32.gmra.mrb[0].mxu0 %v342
      %v625 = vpop.f32.mrb[0].mxu0
      %v626 = vadd.f32 %v481, %v625
      %v627 = vpop.f32.mrb[0].mxu0
      %628 = vmatprep.mubr.f32.mxu0 0.0
      %629 = vmatmul.mubr.f32.gmra.mrb[0].mxu0 %v343
      %v630 = vpop.f32.mrb[0].mxu0
      %v631 = vadd.f32 %v486, %v630
      %v632 = vpop.f32.mrb[0].mxu0
      %633 = vmatprep.mubr.f32.mxu0 0.0
      %634 = vmatmul.mubr.f32.gmra.mrb[0].mxu0 %v344
      %v635 = vpop.f32.mrb[0].mxu0
      %v636 = vadd.f32 %v491, %v635
      %v637 = vpop.f32.mrb[0].mxu0
      %638 = vmatprep.mubr.f32.mxu0 0.0
      %639 = vmatmul.mubr.f32.gmra.mrb[0].mxu0 %v345
      %v640 = vpop.f32.mrb[0].mxu0
      %v641 = vadd.f32 %v496, %v640
      %v642 = vpop.f32.mrb[0].mxu0
      %643 = vmatprep.mubr.f32.mxu0 0.0
      %644 = vmatmul.mubr.f32.gmra.mrb[0].mxu0 %v346
      %v645 = vpop.f32.mrb[0].mxu0
      %v646 = vadd.f32 %v501, %v645
      %v647 = vpop.f32.mrb[0].mxu0
      %648 = vmatprep.mubr.f32.mxu0 0.0
      %649 = vmatmul.mubr.f32.gmra.mrb[0].mxu0 %v347
      %v650 = vpop.f32.mrb[0].mxu0
      %v651 = vadd.f32 %v506, %v650
      %v652 = vpop.f32.mrb[0].mxu0
      %653 = vmatprep.mubr.f32.mxu0 0.0
      %654 = vmatmul.mubr.f32.gmra.mrb[0].mxu0 %v348
      %v655 = vpop.f32.mrb[0].mxu0
      %v656 = vadd.f32 %v511, %v655
      %v657 = vpop.f32.mrb[0].mxu0
      %658 = vmatprep.mubr.f32.mxu0 0.0
      %659 = vmatmul.mubr.f32.gmra.mrb[0].mxu0 %v349
      %v660 = vpop.f32.mrb[0].mxu0
      %v661 = vadd.f32 %v516, %v660
      %v662 = vpop.f32.mrb[0].mxu0
      %663 = vmatprep.mubr.f32.mxu0 0.0
      %664 = vmatmul.mubr.f32.gmra.mrb[0].mxu0 %v350
      %v665 = vpop.f32.mrb[0].mxu0
      %v666 = vadd.f32 %v521, %v665
      %v667 = vpop.f32.mrb[0].mxu0
      %668 = vmatprep.mubr.f32.mxu0 0.0
      %669 = vmatmul.mubr.f32.gmra.mrb[0].mxu0 %v351
      %v670 = vpop.f32.mrb[0].mxu0
      %v671 = vadd.f32 %v526, %v670
      %v672 = vpop.f32.mrb[0].mxu0
      %673 = vmatprep.mubr.f32.mxu0 0.0
      %674 = vmatmul.mubr.f32.gmra.mrb[0].mxu0 %v352
      %v675 = vpop.f32.mrb[0].mxu0
      %v676 = vadd.f32 %v531, %v675
      %v677 = vpop.f32.mrb[0].mxu0
      %678 = vmatprep.mubr.f32.mxu0 0.0
      %679 = vmatmul.mubr.f32.gmra.mrb[0].mxu0 %v353
      %v680 = vpop.f32.mrb[0].mxu0
      %v681 = vadd.f32 %v536, %v680
      %v682 = vpop.f32.mrb[0].mxu0
      %683 = vmatprep.mubr.f32.mxu0 0.0
      %684 = vmatmul.mubr.f32.gmra.mrb[0].mxu0 %v354
      %v685 = vpop.f32.mrb[0].mxu0
      %v686 = vadd.f32 %v541, %v685
      %v687 = vpop.f32.mrb[0].mxu0
      %688 = vmatprep.mubr.f32.mxu0 0.0
      %689 = vmatmul.mubr.f32.gmra.mrb[0].mxu0 %v355
      %v690 = vpop.f32.mrb[0].mxu0
      %v691 = vadd.f32 %v546, %v690
      %v692 = vpop.f32.mrb[0].mxu0
      %693 = vdwg.mxu0
      %v694 = vld [vmem:[%s5] sm:$0x1]
      %v696 = vlaneseq
      %v697 = vshrl.u32 %v696, 7
      %v698 = vsub.s32 0, %v697
      %v699 = vrot.slane %v694, %v698
      %v701 = vadd.f32 %v616, %v699
      %v702 = vadd.f32 %v621, %v699
      %v703 = vadd.f32 %v626, %v699
      %v704 = vadd.f32 %v631, %v699
      %v705 = vadd.f32 %v636, %v699
      %v706 = vadd.f32 %v641, %v699
      %v707 = vadd.f32 %v646, %v699
      %v708 = vadd.f32 %v651, %v699
      %v709 = vadd.f32 %v656, %v699
      %v710 = vadd.f32 %v661, %v699
      %v711 = vadd.f32 %v666, %v699
      %v712 = vadd.f32 %v671, %v699
      %v713 = vadd.f32 %v676, %v699
      %v714 = vadd.f32 %v681, %v699
      %v715 = vadd.f32 %v686, %v699
      %v716 = vadd.f32 %v691, %v699
      %717 = vst [vmem:[#allocation12] sm:$0xff] %v701
      %718 = vst [vmem:[#allocation12 + $0x8] sm:$0xff] %v702
      %719 = vst [vmem:[#allocation12 + $0x10] sm:$0xff] %v703
      %720 = vst [vmem:[#allocation12 + $0x18] sm:$0xff] %v704
      %721 = vst [vmem:[#allocation12 + $0x20] sm:$0xff] %v705
      %722 = vst [vmem:[#allocation12 + $0x28] sm:$0xff] %v706
      %723 = vst [vmem:[#allocation12 + $0x30] sm:$0xff] %v707
      %724 = vst [vmem:[#allocation12 + $0x38] sm:$0xff] %v708
      %725 = vst [vmem:[#allocation12 + $0x40] sm:$0xff] %v709
      %726 = vst [vmem:[#allocation12 + $0x48] sm:$0xff] %v710
      %727 = vst [vmem:[#allocation12 + $0x50] sm:$0xff] %v711
      %728 = vst [vmem:[#allocation12 + $0x58] sm:$0xff] %v712
      %729 = vst [vmem:[#allocation12 + $0x60] sm:$0xff] %v713
      %730 = vst [vmem:[#allocation12 + $0x68] sm:$0xff] %v714
      %731 = vst [vmem:[#allocation12 + $0x70] sm:$0xff] %v715
      %732 = vst [vmem:[#allocation12 + $0x78] sm:$0xff] %v716
    $region53: #{tpu_custom_call.1} parent=1 // pred_fallthru
      _
    // Predicated region
    $region54: #{tpu_custom_call.1} parent=1 // pred_check
      _
    $region55: #{tpu_custom_call.1} parent=1 // pred_check_branch
      %734 = sbr.rel (0) target = $region57
    $region56: #{tpu_custom_call.1} parent=1 // pred_region
      %s736 = ssub.s32 2048, 2048
      %737 = vsyncadd [#allocation5], %s736
      %s738 = sshll.u32 [#allocation12], 4
      %s739 = int_to_ptr.vmem [resolvable:$true] %s738
      %744 = dma.vmem_to_hbm [thread:$0]  %s739, 2048, %s6, [#allocation5], 128, 128, 8
    $region57: #{tpu_custom_call.1} parent=1 // pred_fallthru
      _
    // Predicated region
    $region58: #{tpu_custom_call.1} parent=1 // pred_check
      _
    $region59: #{tpu_custom_call.1} parent=1 // pred_check_branch
      %746 = sbr.rel (0) target = $region61
    $region60: #{tpu_custom_call.1} parent=1 // pred_region
      %747 = dma.done [#allocation5], 2048
    $region61: #{tpu_custom_call.1} parent=1 // pred_fallthru
      _
    %748 = vsyncpa [#allocation4], 1
    %749 = vsyncpa [#allocation7], 1
    %750 = vsyncpa [#allocation10], 1
    %751 = vsyncpa [#allocation5], 1

</llo_original>
